<compile_context>
chip_gen: v7x
topology: tpu7x:2x2x1
jax: 0.10.0
libtpu: 0.0.40
codegen_flags: <defaults>
</compile_context>

<pallas_src>
import math
from functools import partial

import jax
import jax.numpy as jnp
from jax.experimental import pallas as pl
from jax.experimental.pallas import tpu as pltpu

LANES = 128
SUBLANES = 8
_SMALL_FOOTPRINT_BYTES = 1 << 20          # below this, skip the grid entirely
_MAX_TILE_ROWS = 1024                     # rows of 128 lanes per d-tile
_VMEM_BUDGET_PER_BUFFER = 12 << 20        # x2 double-buffered ~= 24 MiB live


def _round_up(n, m):
    return ((n + m - 1) // m) * m


def _layout_rows(D, max_tile_rows=_MAX_TILE_ROWS):
    """Return (R, TR): padded row count R (multiple of TR and of 8) and the
    d-tile row count TR, for a flattened feature size D laid out as (R, 128).
    TR is chosen first; R is padded up to a multiple of TR (no divisor cliff)."""
    r = _round_up(pl.cdiv(D, LANES), SUBLANES)
    if r <= max_tile_rows:
        return r, r
    nd = pl.cdiv(r, max_tile_rows)
    tr = _round_up(pl.cdiv(r, nd), SUBLANES)
    return nd * tr, tr


# --------------------------------------------------------------------------
# Kernel body (shared by the small single-block path and the tiled path).
#   x / h_out / c_out : (TB, TR, 128)   (or (B, R, 128) on the small path)
#   w                 : (8, TR, 128)    rows 0..3 = weight_ih, 4..7 = weight_hh
#   b                 : (4, TR, 128)    bias_ih + bias_hh, fused offline
#   h, c              : (TR, 128)
# Broadcasting of the (TR,128) params/state against (TB,TR,128) x handles both.
# --------------------------------------------------------------------------
def _lstm_kernel(x_ref, w_ref, b_ref, h_ref, c_ref, h_out_ref, c_out_ref):
    x = x_ref[...].astype(jnp.float32)
    h = h_ref[...].astype(jnp.float32)
    c = c_ref[...].astype(jnp.float32)

    def gate(k):
        wih = w_ref[k].astype(jnp.float32)
        whh = w_ref[4 + k].astype(jnp.float32)
        bk = b_ref[k].astype(jnp.float32)
        return wih * x + (whh * h + bk)

    # 3 sigmoids + 2 tanh per element go to the EUP slot (free while the
    # kernel is HBM-bound); all mul/add stay on the VPU.
    i = jax.nn.sigmoid(gate(0))
    f = jax.nn.sigmoid(gate(1))
    g = jnp.tanh(gate(2))
    o = jax.nn.sigmoid(gate(3))

    c_new = f * c + i * g
    h_new = o * jnp.tanh(c_new)

    h_out_ref[...] = h_new.astype(h_out_ref.dtype)
    c_out_ref[...] = c_new.astype(c_out_ref.dtype)


# --------------------------------------------------------------------------
# Layout helpers / one-time parameter prep.
# --------------------------------------------------------------------------
def to_padded_layout(v, input_dim, R):
    """(..., *input_dim) -> (..., R, 128) zero-padded lane-dense layout."""
    D = int(math.prod(input_dim))
    lead = v.shape[: v.ndim - len(input_dim)]
    v = v.reshape(*lead, D)
    pad = R * LANES - D
    if pad:
        v = jnp.pad(v, [(0, 0)] * len(lead) + [(0, pad)])
    return v.reshape(*lead, R, LANES)


def from_padded_layout(v, input_dim):
    """(..., R, 128) -> (..., *input_dim), dropping the zero padding."""
    D = int(math.prod(input_dim))
    lead = v.shape[:-2]
    flat = v.reshape(*lead, v.shape[-2] * LANES)
    return flat[..., :D].reshape(*lead, *input_dim)


def prepare_i_to_i_lstm_params(weight_ih, weight_hh, bias_ih, bias_hh, input_dim,
                               weight_dtype=jnp.bfloat16):
    """One-time parameter prep (call OUTSIDE the per-step path).

    Returns:
      w8: (8, R, 128) weight_dtype  -- weight_ih (rows 0..3) ++ weight_hh (4..7)
      b4: (4, R, 128) float32       -- bias_ih + bias_hh, fused
    Weights default to bf16 to halve the dominant parameter HBM traffic at
    small batch; pass weight_dtype=jnp.float32 for bit-exact-ish numerics.
    """
    D = int(math.prod(input_dim))
    R, _ = _layout_rows(D)
    pad = R * LANES - D

    def lay(p, n, dtype):
        p = jnp.asarray(p, jnp.float32).reshape(n, D)
        if pad:
            p = jnp.pad(p, ((0, 0), (0, pad)))
        return p.reshape(n, R, LANES).astype(dtype)

    w8 = jnp.concatenate(
        [jnp.asarray(weight_ih, jnp.float32).reshape(4, D),
         jnp.asarray(weight_hh, jnp.float32).reshape(4, D)], axis=0)
    w8 = lay(w8, 8, weight_dtype)
    b4 = lay(jnp.asarray(bias_ih, jnp.float32) + jnp.asarray(bias_hh, jnp.float32),
             4, jnp.float32)
    return w8, b4


# --------------------------------------------------------------------------
# Core forward on the padded (.., R, 128) layout (no pad/unpad HBM passes).
# Multi-timestep callers should call this directly and keep h/c padded.
# --------------------------------------------------------------------------
@partial(jax.jit, static_argnames=("h_dtype", "c_dtype"))
def i_to_i_lstm_cell_padded(x3, w8, b4, h3, c3, *, h_dtype=None, c_dtype=None):
    """x3: (B, R, 128); w8: (8, R, 128); b4: (4, R, 128); h3/c3: (R, 128).
    Returns (h3_new, c3_new), each (B, R, 128) in the padded layout."""
    B, R, _ = x3.shape
    h_dtype = jnp.dtype(x3.dtype if h_dtype is None else h_dtype)
    c_dtype = jnp.dtype(x3.dtype if c_dtype is None else c_dtype)

    out_shape = (jax.ShapeDtypeStruct((B, R, LANES), h_dtype),
                 jax.ShapeDtypeStruct((B, R, LANES), c_dtype))

    total_bytes = (x3.size * x3.dtype.itemsize
                   + B * R * LANES * (h_dtype.itemsize + c_dtype.itemsize)
                   + w8.size * w8.dtype.itemsize
                   + b4.size * b4.dtype.itemsize
                   + h3.size * h3.dtype.itemsize
                   + c3.size * c3.dtype.itemsize)

    if total_bytes <= _SMALL_FOOTPRINT_BYTES:
        # Tiny problem: one whole-array VMEM block; grid steps would be pure
        # per-step overhead here.
        vmem = pl.BlockSpec(memory_space=pltpu.MemorySpace.VMEM)
        return pl.pallas_call(
            _lstm_kernel,
            out_shape=out_shape,
            in_specs=[vmem] * 5,
            out_specs=(vmem, vmem),
        )(x3, w8, b4, h3, c3)

    # ---- Tiled, pipelined path -------------------------------------------
    R_chk, TR = _layout_rows(R * LANES)
    if R_chk != R or R % TR:
        raise ValueError("padded inputs must come from prepare_i_to_i_lstm_params"
                         " / to_padded_layout (non-canonical row count %d)" % R)

    # Per-d-tile, per-pipeline-buffer byte counts.
    param_state_per_buf = TR * LANES * (8 * w8.dtype.itemsize
                                        + 4 * b4.dtype.itemsize
                                        + h3.dtype.itemsize + c3.dtype.itemsize)
    act_per_batch_per_buf = TR * LANES * (x3.dtype.itemsize
                                          + h_dtype.itemsize + c_dtype.itemsize)
    tb_max = max(1, (_VMEM_BUDGET_PER_BUFFER - param_state_per_buf)
                 // act_per_batch_per_buf)

    if B <= tb_max:
        TB, nb, x_in = B, 1, x3                 # whole batch folded into the block
    else:
        nb = pl.cdiv(B, tb_max)
        TB = pl.cdiv(B, nb)                     # near-even batch tiles
        Bp = nb * TB
        x_in = jnp.pad(x3, ((0, Bp - B), (0, 0), (0, 0))) if Bp != B else x3
    Bp = x_in.shape[0]

    out_shape = (jax.ShapeDtypeStruct((Bp, R, LANES), h_dtype),
                 jax.ShapeDtypeStruct((Bp, R, LANES), c_dtype))

    # grid = (d-tiles, batch-tiles); batch innermost so the param / h / c
    # block indices are unchanged across the batch sweep (no redundant DMA).
    x_spec = pl.BlockSpec((TB, TR, LANES), lambda d, b: (b, d, 0))
    w_spec = pl.BlockSpec((8, TR, LANES), lambda d, b: (0, d, 0))
    b_spec = pl.BlockSpec((4, TR, LANES), lambda d, b: (0, d, 0))
    s_spec = pl.BlockSpec((TR, LANES), lambda d, b: (d, 0))

    live_vmem = 2 * (param_state_per_buf + TB * act_per_batch_per_buf)
    vmem_limit = int(min(max(live_vmem + (4 << 20), 16 << 20), 48 << 20))

    h_new, c_new = pl.pallas_call(
        _lstm_kernel,
        out_shape=out_shape,
        grid_spec=pltpu.PrefetchScalarGridSpec(
            num_scalar_prefetch=0,
            grid=(R // TR, nb),
            in_specs=[x_spec, w_spec, b_spec, s_spec, s_spec],
            out_specs=(x_spec, x_spec),
        ),
        compiler_params=pltpu.CompilerParams(
            # Megacore (v7x) shards the d-tile axis only, never batch, so the
            # parameter/state streams are fetched once (1x traffic).
            dimension_semantics=("parallel", "arbitrary"),
            vmem_limit_bytes=vmem_limit),
    )(x_in, w8, b4, h3, c3)

    if Bp != B:
        h_new, c_new = h_new[:B], c_new[:B]
    return h_new, c_new


# --------------------------------------------------------------------------
# Convenience wrapper with PyTorch-shaped I/O.
# --------------------------------------------------------------------------
@partial(jax.jit, static_argnames=("input_dim", "h_dtype", "c_dtype"))
def i_to_i_lstm_cell(x, w8, b4, h, c, *, input_dim, h_dtype=None, c_dtype=None):
    """x: (B, *input_dim); w8/b4 from prepare_i_to_i_lstm_params;
    h, c: (*input_dim) (shared across the batch, matching the PyTorch module).
    Returns (h_new, c_new), each (B, *input_dim).

    For multi-timestep recurrence, prefer i_to_i_lstm_cell_padded on the
    padded layout (skips per-step pad/unpad HBM passes) and pass
    c_dtype=jnp.float32 when activations are bf16 so repeated rounding of the
    cell state does not accumulate."""
    R = w8.shape[1]
    x3 = to_padded_layout(x, input_dim, R)
    h3 = to_padded_layout(h, input_dim, R)
    c3 = to_padded_layout(c, input_dim, R)
    h3n, c3n = i_to_i_lstm_cell_padded(x3, w8, b4, h3, c3,
                                       h_dtype=h_dtype, c_dtype=c_dtype)
    return (from_padded_layout(h3n, input_dim),
            from_padded_layout(c3n, input_dim))


# --------------------------------------------------------------------------
# Reference + init helpers (pure JAX, for the self-check).
# --------------------------------------------------------------------------
def _xavier_uniform(key, shape):
    # PyTorch xavier_uniform_ on a (4, 1, *input_dim) tensor.
    rf = int(math.prod(shape[2:]))
    fan_in, fan_out = shape[1] * rf, shape[0] * rf
    bound = math.sqrt(6.0 / (fan_in + fan_out))
    return jax.random.uniform(key, shape, jnp.float32, -bound, bound)


def _reference_forward(x, wih, whh, bih, bhh, h, c):
    gates = wih * x + bih + (whh * h + bhh)          # (4, B, *input_dim)
    i = jax.nn.sigmoid(gates[0])
    f = jax.nn.sigmoid(gates[1])
    g = jnp.tanh(gates[2])
    o = jax.nn.sigmoid(gates[3])
    c_new = f * c + i * g
    h_new = o * jnp.tanh(c_new)
    return h_new, c_new


def _run_case(key, B, input_dim, zero_hidden, weight_dtype, atol, rtol):
    k_x, k_wih, k_whh, k_bih, k_bhh, k_h, k_c = jax.random.split(key, 7)
    x = jax.random.normal(k_x, (B, *input_dim), jnp.float32)
    weight_ih = _xavier_uniform(k_wih, (4, 1, *input_dim))
    weight_hh = _xavier_uniform(k_whh, (4, 1, *input_dim))
    bias_ih = _xavier_uniform(k_bih, (4, 1, *input_dim))
    bias_hh = _xavier_uniform(k_bhh, (4, 1, *input_dim))
    if zero_hidden:   # hidden_state=None path of the module
        h0 = jnp.zeros(input_dim, jnp.float32)
        c0 = jnp.zeros(input_dim, jnp.float32)
    else:
        h0 = jax.random.normal(k_h, input_dim, jnp.float32)
        c0 = jax.random.normal(k_c, input_dim, jnp.float32)

    # One-time parameter prep (bias fusion + concatenated padded layout).
    w8, b4 = prepare_i_to_i_lstm_params(weight_ih, weight_hh, bias_ih, bias_hh,
                                        input_dim, weight_dtype=weight_dtype)

    h_new, c_new = i_to_i_lstm_cell(x, w8, b4, h0, c0, input_dim=input_dim)
    jax.block_until_ready((h_new, c_new))

    h_ref, c_ref = _reference_forward(x, weight_ih, weight_hh,
                                      bias_ih, bias_hh, h0, c0)
    assert h_new.shape == (B, *input_dim) and c_new.shape == (B, *input_dim)
    assert jnp.allclose(h_new, h_ref, atol=atol, rtol=rtol)
    assert jnp.allclose(c_new, c_ref, atol=atol, rtol=rtol)


if __name__ == "__main__":
    key = jax.random.PRNGKey(0)
    k1, k2, k3, k4 = jax.random.split(key, 4)

    # 1) Spec-sized demo: B=2, (C,H,W)=(4,16,16); D=1024 -> small single-block
    #    path, f32 weights, tight tolerance (validates kernel math exactly).
    _run_case(k1, B=2, input_dim=(4, 16, 16), zero_hidden=True,
              weight_dtype=jnp.float32, atol=1e-5, rtol=1e-5)

    # 2) Non-128-aligned feature size + bf16 weight stream: pad/unpad path.
    _run_case(k2, B=2, input_dim=(3, 10, 10), zero_hidden=False,
              weight_dtype=jnp.bfloat16, atol=2e-2, rtol=2e-2)

    # 3) Larger case: tiled/pipelined grid path (2 d-tiles, full batch in block).
    _run_case(k3, B=2, input_dim=(16, 128, 128), zero_hidden=False,
              weight_dtype=jnp.bfloat16, atol=2e-2, rtol=2e-2)

    # 4) Larger batch: exercises batch tiling (TB < B) + ragged batch pad.
    _run_case(k4, B=10, input_dim=(16, 128, 128), zero_hidden=False,
              weight_dtype=jnp.bfloat16, atol=2e-2, rtol=2e-2)

    print("KERNEL_OK")
</pallas_src>

<mosaic_0001>
module attributes {stable_mosaic.version = 11 : i64} {
  func.func @_lstm_kernel(%arg0: memref<2x8x128xf32, #tpu.memory_space<vmem>>, %arg1: memref<8x8x128xf32, #tpu.memory_space<vmem>>, %arg2: memref<4x8x128xf32, #tpu.memory_space<vmem>>, %arg3: memref<8x128xf32, #tpu.memory_space<vmem>>, %arg4: memref<8x128xf32, #tpu.memory_space<vmem>>, %arg5: memref<2x8x128xf32, #tpu.memory_space<vmem>>, %arg6: memref<2x8x128xf32, #tpu.memory_space<vmem>>) attributes {dimension_semantics = [], scalar_prefetch = 0 : i64, scratch_operands = 0 : i64, tpu.core_type = #tpu.core_type<tc>} {
    %c0 = arith.constant 0 : index
    %c0_0 = arith.constant 0 : index
    %c0_1 = arith.constant 0 : index
    %0 = vector.load %arg0[%c0, %c0_0, %c0_1] : memref<2x8x128xf32, #tpu.memory_space<vmem>>, vector<2x8x128xf32>
    %c0_2 = arith.constant 0 : index
    %c0_3 = arith.constant 0 : index
    %1 = vector.load %arg3[%c0_2, %c0_3] : memref<8x128xf32, #tpu.memory_space<vmem>>, vector<8x128xf32>
    %c0_4 = arith.constant 0 : index
    %c0_5 = arith.constant 0 : index
    %2 = vector.load %arg4[%c0_4, %c0_5] : memref<8x128xf32, #tpu.memory_space<vmem>>, vector<8x128xf32>
    %c0_6 = arith.constant 0 : index
    %c0_7 = arith.constant 0 : index
    %c0_8 = arith.constant 0 : index
    %3 = vector.load %arg1[%c0_6, %c0_7, %c0_8] : memref<8x8x128xf32, #tpu.memory_space<vmem>>, vector<1x8x128xf32>
    %4 = vector.shape_cast %3 : vector<1x8x128xf32> to vector<8x128xf32>
    %c4 = arith.constant 4 : index
    %c0_9 = arith.constant 0 : index
    %c0_10 = arith.constant 0 : index
    %5 = vector.load %arg1[%c4, %c0_9, %c0_10] : memref<8x8x128xf32, #tpu.memory_space<vmem>>, vector<1x8x128xf32>
    %6 = vector.shape_cast %5 : vector<1x8x128xf32> to vector<8x128xf32>
    %c0_11 = arith.constant 0 : index
    %c0_12 = arith.constant 0 : index
    %c0_13 = arith.constant 0 : index
    %7 = vector.load %arg2[%c0_11, %c0_12, %c0_13] : memref<4x8x128xf32, #tpu.memory_space<vmem>>, vector<1x8x128xf32>
    %8 = vector.shape_cast %7 : vector<1x8x128xf32> to vector<8x128xf32>
    %9 = vector.shape_cast %4 : vector<8x128xf32> to vector<1x8x128xf32>
    %10 = vector.broadcast %9 : vector<1x8x128xf32> to vector<2x8x128xf32>
    %11 = arith.mulf %10, %0 : vector<2x8x128xf32>
    %12 = arith.mulf %6, %1 : vector<8x128xf32>
    %13 = arith.addf %12, %8 : vector<8x128xf32>
    %14 = vector.shape_cast %13 : vector<8x128xf32> to vector<1x8x128xf32>
    %15 = vector.broadcast %14 : vector<1x8x128xf32> to vector<2x8x128xf32>
    %16 = arith.addf %11, %15 : vector<2x8x128xf32>
    %17 = arith.negf %16 : vector<2x8x128xf32>
    %18 = math.exp %17 : vector<2x8x128xf32>
    %cst = arith.constant 1.000000e+00 : f32
    %19 = vector.broadcast %cst : f32 to vector<2x8x128xf32>
    %20 = arith.addf %19, %18 : vector<2x8x128xf32>
    %21 = arith.divf %19, %20 : vector<2x8x128xf32>
    %c1 = arith.constant 1 : index
    %c0_14 = arith.constant 0 : index
    %c0_15 = arith.constant 0 : index
    %22 = vector.load %arg1[%c1, %c0_14, %c0_15] : memref<8x8x128xf32, #tpu.memory_space<vmem>>, vector<1x8x128xf32>
    %23 = vector.shape_cast %22 : vector<1x8x128xf32> to vector<8x128xf32>
    %c5 = arith.constant 5 : index
    %c0_16 = arith.constant 0 : index
    %c0_17 = arith.constant 0 : index
    %24 = vector.load %arg1[%c5, %c0_16, %c0_17] : memref<8x8x128xf32, #tpu.memory_space<vmem>>, vector<1x8x128xf32>
    %25 = vector.shape_cast %24 : vector<1x8x128xf32> to vector<8x128xf32>
    %c1_18 = arith.constant 1 : index
    %c0_19 = arith.constant 0 : index
    %c0_20 = arith.constant 0 : index
    %26 = vector.load %arg2[%c1_18, %c0_19, %c0_20] : memref<4x8x128xf32, #tpu.memory_space<vmem>>, vector<1x8x128xf32>
    %27 = vector.shape_cast %26 : vector<1x8x128xf32> to vector<8x128xf32>
    %28 = vector.shape_cast %23 : vector<8x128xf32> to vector<1x8x128xf32>
    %29 = vector.broadcast %28 : vector<1x8x128xf32> to vector<2x8x128xf32>
    %30 = arith.mulf %29, %0 : vector<2x8x128xf32>
    %31 = arith.mulf %25, %1 : vector<8x128xf32>
    %32 = arith.addf %31, %27 : vector<8x128xf32>
    %33 = vector.shape_cast %32 : vector<8x128xf32> to vector<1x8x128xf32>
    %34 = vector.broadcast %33 : vector<1x8x128xf32> to vector<2x8x128xf32>
    %35 = arith.addf %30, %34 : vector<2x8x128xf32>
    %36 = arith.negf %35 : vector<2x8x128xf32>
    %37 = math.exp %36 : vector<2x8x128xf32>
    %cst_21 = arith.constant 1.000000e+00 : f32
    %38 = vector.broadcast %cst_21 : f32 to vector<2x8x128xf32>
    %39 = arith.addf %38, %37 : vector<2x8x128xf32>
    %40 = arith.divf %38, %39 : vector<2x8x128xf32>
    %c2 = arith.constant 2 : index
    %c0_22 = arith.constant 0 : index
    %c0_23 = arith.constant 0 : index
    %41 = vector.load %arg1[%c2, %c0_22, %c0_23] : memref<8x8x128xf32, #tpu.memory_space<vmem>>, vector<1x8x128xf32>
    %42 = vector.shape_cast %41 : vector<1x8x128xf32> to vector<8x128xf32>
    %c6 = arith.constant 6 : index
    %c0_24 = arith.constant 0 : index
    %c0_25 = arith.constant 0 : index
    %43 = vector.load %arg1[%c6, %c0_24, %c0_25] : memref<8x8x128xf32, #tpu.memory_space<vmem>>, vector<1x8x128xf32>
    %44 = vector.shape_cast %43 : vector<1x8x128xf32> to vector<8x128xf32>
    %c2_26 = arith.constant 2 : index
    %c0_27 = arith.constant 0 : index
    %c0_28 = arith.constant 0 : index
    %45 = vector.load %arg2[%c2_26, %c0_27, %c0_28] : memref<4x8x128xf32, #tpu.memory_space<vmem>>, vector<1x8x128xf32>
    %46 = vector.shape_cast %45 : vector<1x8x128xf32> to vector<8x128xf32>
    %47 = vector.shape_cast %42 : vector<8x128xf32> to vector<1x8x128xf32>
    %48 = vector.broadcast %47 : vector<1x8x128xf32> to vector<2x8x128xf32>
    %49 = arith.mulf %48, %0 : vector<2x8x128xf32>
    %50 = arith.mulf %44, %1 : vector<8x128xf32>
    %51 = arith.addf %50, %46 : vector<8x128xf32>
    %52 = vector.shape_cast %51 : vector<8x128xf32> to vector<1x8x128xf32>
    %53 = vector.broadcast %52 : vector<1x8x128xf32> to vector<2x8x128xf32>
    %54 = arith.addf %49, %53 : vector<2x8x128xf32>
    %55 = math.tanh %54 : vector<2x8x128xf32>
    %c3 = arith.constant 3 : index
    %c0_29 = arith.constant 0 : index
    %c0_30 = arith.constant 0 : index
    %56 = vector.load %arg1[%c3, %c0_29, %c0_30] : memref<8x8x128xf32, #tpu.memory_space<vmem>>, vector<1x8x128xf32>
    %57 = vector.shape_cast %56 : vector<1x8x128xf32> to vector<8x128xf32>
    %c7 = arith.constant 7 : index
    %c0_31 = arith.constant 0 : index
    %c0_32 = arith.constant 0 : index
    %58 = vector.load %arg1[%c7, %c0_31, %c0_32] : memref<8x8x128xf32, #tpu.memory_space<vmem>>, vector<1x8x128xf32>
    %59 = vector.shape_cast %58 : vector<1x8x128xf32> to vector<8x128xf32>
    %c3_33 = arith.constant 3 : index
    %c0_34 = arith.constant 0 : index
    %c0_35 = arith.constant 0 : index
    %60 = vector.load %arg2[%c3_33, %c0_34, %c0_35] : memref<4x8x128xf32, #tpu.memory_space<vmem>>, vector<1x8x128xf32>
    %61 = vector.shape_cast %60 : vector<1x8x128xf32> to vector<8x128xf32>
    %62 = vector.shape_cast %57 : vector<8x128xf32> to vector<1x8x128xf32>
    %63 = vector.broadcast %62 : vector<1x8x128xf32> to vector<2x8x128xf32>
    %64 = arith.mulf %63, %0 : vector<2x8x128xf32>
    %65 = arith.mulf %59, %1 : vector<8x128xf32>
    %66 = arith.addf %65, %61 : vector<8x128xf32>
    %67 = vector.shape_cast %66 : vector<8x128xf32> to vector<1x8x128xf32>
    %68 = vector.broadcast %67 : vector<1x8x128xf32> to vector<2x8x128xf32>
    %69 = arith.addf %64, %68 : vector<2x8x128xf32>
    %70 = arith.negf %69 : vector<2x8x128xf32>
    %71 = math.exp %70 : vector<2x8x128xf32>
    %cst_36 = arith.constant 1.000000e+00 : f32
    %72 = vector.broadcast %cst_36 : f32 to vector<2x8x128xf32>
    %73 = arith.addf %72, %71 : vector<2x8x128xf32>
    %74 = arith.divf %72, %73 : vector<2x8x128xf32>
    %75 = vector.shape_cast %2 : vector<8x128xf32> to vector<1x8x128xf32>
    %76 = vector.broadcast %75 : vector<1x8x128xf32> to vector<2x8x128xf32>
    %77 = arith.mulf %40, %76 : vector<2x8x128xf32>
    %78 = arith.mulf %21, %55 : vector<2x8x128xf32>
    %79 = arith.addf %77, %78 : vector<2x8x128xf32>
    %80 = math.tanh %79 : vector<2x8x128xf32>
    %81 = arith.mulf %74, %80 : vector<2x8x128xf32>
    %c0_37 = arith.constant 0 : index
    %c0_38 = arith.constant 0 : index
    %c0_39 = arith.constant 0 : index
    %82 = vector.load %arg5[%c0_37, %c0_38, %c0_39] : memref<2x8x128xf32, #tpu.memory_space<vmem>>, vector<2x8x128xf32>
    tpu.vector_store %arg5[%c0_37, %c0_38, %c0_39], %81 {strides = array<i32>} : memref<2x8x128xf32, #tpu.memory_space<vmem>>, vector<2x8x128xf32>,
    %c0_40 = arith.constant 0 : index
    %c0_41 = arith.constant 0 : index
    %c0_42 = arith.constant 0 : index
    %83 = vector.load %arg6[%c0_40, %c0_41, %c0_42] : memref<2x8x128xf32, #tpu.memory_space<vmem>>, vector<2x8x128xf32>
    tpu.vector_store %arg6[%c0_40, %c0_41, %c0_42], %79 {strides = array<i32>} : memref<2x8x128xf32, #tpu.memory_space<vmem>>, vector<2x8x128xf32>,
    return
  }
}

</mosaic_0001>

<llo_original>
// kernel: i_to_i_lstm_cell_padded.1
$region0: #{i_to_i_lstm_cell_padded.1}
  #allocation0 [shape = 'u32[]', space=smem, size = 0x4, offset = 0x4, fixed_abs, tag = 'smem constant byte address 0x4 - core index']
  #allocation1 [shape = 'u32[144,128]{1,0:T(1,128)}', space=vmem, size = 0x12000, scoped, tag = 'internal scratch']
  %s0 = inlined_call_operand.hbm [shape: f32[2,8,128], index: 0, kind: input, shape index: {}]
  %s1 = inlined_call_operand.hbm [shape: f32[8,8,128], index: 1, kind: input, shape index: {}]
  %s2 = inlined_call_operand.hbm [shape: f32[4,8,128], index: 2, kind: input, shape index: {}]
  %s3 = inlined_call_operand.vmem [shape: f32[8,128], index: 3, kind: input, shape index: {}]
  %s4 = inlined_call_operand.hbm [shape: f32[8,128], index: 4, kind: input, shape index: {}]
  %s5 = inlined_call_operand.hbm [shape: f32[2,8,128], index: 5, kind: output, shape index: {0}]
  %s6 = inlined_call_operand.hbm [shape: f32[2,8,128], index: 6, kind: output, shape index: {1}]
  %7 = xla_tuple %s5, %s6
  %s8 = sld [smem:[#allocation0]]
  $region54: #{i_to_i_lstm_cell_padded.1} parent=0
    _
  %s10 = ssub.s32 1, %s8
  %s11 = scalar_select 0, %s10, %s8
  $region1: #{i_to_i_lstm_cell_padded.1} parent=0
    #allocation2 [shape = 'u8[8192]{0}', space=vmem, size = 0x2000, scoped, tag = 'input window, operand 0, single buffered']
    #allocation3 [shape = 's32[1]{0}', space=sflag, size = 0x4, scoped, tag = 'scoped memory for i_to_i_lstm_cell_padded.1']
    #allocation4 [shape = 's32[1]{0}', space=sflag, size = 0x4, scoped, tag = 'scoped memory for i_to_i_lstm_cell_padded.1']
    #allocation5 [shape = 'u8[32768]{0}', space=vmem, size = 0x8000, scoped, tag = 'input window, operand 1, single buffered']
    #allocation6 [shape = 's32[1]{0}', space=sflag, size = 0x4, scoped, tag = 'scoped memory for i_to_i_lstm_cell_padded.1']
    #allocation7 [shape = 'u8[16384]{0}', space=vmem, size = 0x4000, scoped, tag = 'input window, operand 2, single buffered']
    #allocation8 [shape = 'u8[4096]{0}', space=vmem, size = 0x1000, scoped, tag = 'input window, operand 4, single buffered']
    #allocation9 [shape = 's32[1]{0}', space=sflag, size = 0x4, scoped, tag = 'scoped memory for i_to_i_lstm_cell_padded.1']
    #allocation10 [shape = 'u8[8192]{0}', space=vmem, size = 0x2000, scoped, tag = 'output window, operand 0, single buffered']
    #allocation11 [shape = 'u8[8192]{0}', space=vmem, size = 0x2000, scoped, tag = 'output window, operand 1, single buffered']
    #allocation12 [shape = 's32[1]{0}', space=sflag, size = 0x4, scoped, tag = 'scoped memory for i_to_i_lstm_cell_padded.1']
    %12 = vsyncpa [#allocation3], 0
    %13 = vsyncpa [#allocation6], 0
    %14 = vsyncpa [#allocation9], 0
    %15 = vsyncpa [#allocation4], 0
    %16 = vsyncpa [#allocation12], 0
    // Predicated region
    $region2: #{i_to_i_lstm_cell_padded.1} parent=1 // pred_check
      _
    $region3: #{i_to_i_lstm_cell_padded.1} parent=1 // pred_check_branch
      %18 = sbr.rel (0) target = $region5
    $region4: #{i_to_i_lstm_cell_padded.1} parent=1 // pred_region
      %s20 = ssub.s32 256, 256
      %21 = vsyncadd [#allocation3], %s20
      %s22 = sshll.u32 [#allocation2], 4
      %s23 = int_to_ptr.vmem [resolvable:$true] %s22
      %28 = dma.hbm_to_vmem [thread:$0]  %s0, 256, %s23, [#allocation3], 128, 128, 8
    $region5: #{i_to_i_lstm_cell_padded.1} parent=1 // pred_fallthru
      _
    // Predicated region
    $region6: #{i_to_i_lstm_cell_padded.1} parent=1 // pred_check
      _
    $region7: #{i_to_i_lstm_cell_padded.1} parent=1 // pred_check_branch
      %30 = sbr.rel (0) target = $region9
    $region8: #{i_to_i_lstm_cell_padded.1} parent=1 // pred_region
      %s32 = ssub.s32 1024, 1024
      %33 = vsyncadd [#allocation6], %s32
      %s34 = sshll.u32 [#allocation5], 4
      %s35 = int_to_ptr.vmem [resolvable:$true] %s34
      %40 = dma.hbm_to_vmem [thread:$0]  %s1, 1024, %s35, [#allocation6], 128, 128, 8
    $region9: #{i_to_i_lstm_cell_padded.1} parent=1 // pred_fallthru
      _
    // Predicated region
    $region10: #{i_to_i_lstm_cell_padded.1} parent=1 // pred_check
      _
    $region11: #{i_to_i_lstm_cell_padded.1} parent=1 // pred_check_branch
      %42 = sbr.rel (0) target = $region13
    $region12: #{i_to_i_lstm_cell_padded.1} parent=1 // pred_region
      %s44 = ssub.s32 512, 512
      %45 = vsyncadd [#allocation6], %s44
      %s46 = sshll.u32 [#allocation7], 4
      %s47 = int_to_ptr.vmem [resolvable:$true] %s46
      %52 = dma.hbm_to_vmem [thread:$0]  %s2, 512, %s47, [#allocation6], 128, 128, 8
    $region13: #{i_to_i_lstm_cell_padded.1} parent=1 // pred_fallthru
      _
    // Predicated region
    $region14: #{i_to_i_lstm_cell_padded.1} parent=1 // pred_check
      _
    $region15: #{i_to_i_lstm_cell_padded.1} parent=1 // pred_check_branch
      %54 = sbr.rel (0) target = $region17
    $region16: #{i_to_i_lstm_cell_padded.1} parent=1 // pred_region
      _
    $region17: #{i_to_i_lstm_cell_padded.1} parent=1 // pred_fallthru
      _
    // Predicated region
    $region18: #{i_to_i_lstm_cell_padded.1} parent=1 // pred_check
      _
    $region19: #{i_to_i_lstm_cell_padded.1} parent=1 // pred_check_branch
      %56 = sbr.rel (0) target = $region21
    $region20: #{i_to_i_lstm_cell_padded.1} parent=1 // pred_region
      %s58 = ssub.s32 128, 128
      %59 = vsyncadd [#allocation9], %s58
      %s61 = sshll.u32 [#allocation8], 4
      %s62 = int_to_ptr.vmem [resolvable:$true] %s61
      %64 = dma.hbm_to_vmem [thread:$0]  %s4, 128, %s62, [#allocation9]
    $region21: #{i_to_i_lstm_cell_padded.1} parent=1 // pred_fallthru
      _
    // Predicated region
    $region22: #{i_to_i_lstm_cell_padded.1} parent=1 // pred_check
      _
    $region23: #{i_to_i_lstm_cell_padded.1} parent=1 // pred_check_branch
      %66 = sbr.rel (0) target = $region25
    $region24: #{i_to_i_lstm_cell_padded.1} parent=1 // pred_region
      %67 = dma.done [#allocation3], 256
    $region25: #{i_to_i_lstm_cell_padded.1} parent=1 // pred_fallthru
      _
    // Predicated region
    $region26: #{i_to_i_lstm_cell_padded.1} parent=1 // pred_check
      _
    $region27: #{i_to_i_lstm_cell_padded.1} parent=1 // pred_check_branch
      %69 = sbr.rel (0) target = $region29
    $region28: #{i_to_i_lstm_cell_padded.1} parent=1 // pred_region
      %70 = dma.done [#allocation6], 1024
    $region29: #{i_to_i_lstm_cell_padded.1} parent=1 // pred_fallthru
      _
    // Predicated region
    $region30: #{i_to_i_lstm_cell_padded.1} parent=1 // pred_check
      _
    $region31: #{i_to_i_lstm_cell_padded.1} parent=1 // pred_check_branch
      %72 = sbr.rel (0) target = $region33
    $region32: #{i_to_i_lstm_cell_padded.1} parent=1 // pred_region
      %73 = dma.done [#allocation6], 512
    $region33: #{i_to_i_lstm_cell_padded.1} parent=1 // pred_fallthru
      _
    // Predicated region
    $region34: #{i_to_i_lstm_cell_padded.1} parent=1 // pred_check
      _
    $region35: #{i_to_i_lstm_cell_padded.1} parent=1 // pred_check_branch
      %75 = sbr.rel (0) target = $region37
    $region36: #{i_to_i_lstm_cell_padded.1} parent=1 // pred_region
      %76 = dma.done [#allocation9], 128
    $region37: #{i_to_i_lstm_cell_padded.1} parent=1 // pred_fallthru
      _
    %v77 = vld [vmem:[#allocation2] sm:$0xff]
    %v78 = vld [vmem:[#allocation2 + $0x8] sm:$0xff]
    %v79 = vld [vmem:[%s3] sm:$0xff]
    %v80 = vld [vmem:[#allocation8] sm:$0xff]
    %v81 = vld [vmem:[#allocation5] sm:$0xff]
    %s82 = scalar_lea.vmem [#allocation5], 32
    %v83 = vld [vmem:[%s82] sm:$0xff]
    %v84 = vld [vmem:[#allocation7] sm:$0xff]
    %v85 = vmul.f32 %v81, %v77
    %v86 = vmul.f32 %v81, %v78
    %v87 = vmul.f32 %v83, %v79
    %v88 = vadd.f32 %v87, %v84
    %v89 = vadd.f32 %v85, %v88
    %v90 = vadd.f32 %v86, %v88
    %v91 = vxor.u32 %v89, 2147483648
    %v92 = vxor.u32 %v90, 2147483648
    %v93 = vmul.f32 %v91, 1.442695
    %v94 = vpow.pop %v93
    %v95 = vmul.f32 %v92, 1.442695
    %v96 = vpow.pop %v95
    %v97 = vadd.f32 %v94, 1.0
    %v98 = vadd.f32 %v96, 1.0
    %v99 = vrcp.pop %v97
    %v100 = vmul.f32 1.0, %v99
    %v101 = vrcp.pop %v98
    %v102 = vmul.f32 1.0, %v101
    %s103 = scalar_lea.vmem [#allocation5], 8
    %v104 = vld [vmem:[%s103] sm:$0xff]
    %s105 = scalar_lea.vmem [#allocation5], 40
    %v106 = vld [vmem:[%s105] sm:$0xff]
    %s107 = scalar_lea.vmem [#allocation7], 8
    %v108 = vld [vmem:[%s107] sm:$0xff]
    %v109 = vmul.f32 %v104, %v77
    %v110 = vmul.f32 %v104, %v78
    %v111 = vmul.f32 %v106, %v79
    %v112 = vadd.f32 %v111, %v108
    %v113 = vadd.f32 %v109, %v112
    %v114 = vadd.f32 %v110, %v112
    %v115 = vxor.u32 %v113, 2147483648
    %v116 = vxor.u32 %v114, 2147483648
    %v117 = vmul.f32 %v115, 1.442695
    %v118 = vpow.pop %v117
    %v119 = vmul.f32 %v116, 1.442695
    %v120 = vpow.pop %v119
    %v121 = vadd.f32 %v118, 1.0
    %v122 = vadd.f32 %v120, 1.0
    %v123 = vrcp.pop %v121
    %v124 = vmul.f32 1.0, %v123
    %v125 = vrcp.pop %v122
    %v126 = vmul.f32 1.0, %v125
    %s127 = scalar_lea.vmem [#allocation5], 16
    %v128 = vld [vmem:[%s127] sm:$0xff]
    %s129 = scalar_lea.vmem [#allocation5], 48
    %v130 = vld [vmem:[%s129] sm:$0xff]
    %s131 = scalar_lea.vmem [#allocation7], 16
    %v132 = vld [vmem:[%s131] sm:$0xff]
    %v133 = vmul.f32 %v128, %v77
    %v134 = vmul.f32 %v128, %v78
    %v135 = vmul.f32 %v130, %v79
    %v136 = vadd.f32 %v135, %v132
    %v137 = vadd.f32 %v133, %v136
    %v138 = vadd.f32 %v134, %v136
    %v139 = vtanh.pop %v137
    %v140 = vtanh.pop %v138
    %s141 = scalar_lea.vmem [#allocation5], 24
    %v142 = vld [vmem:[%s141] sm:$0xff]
    %s143 = scalar_lea.vmem [#allocation5], 56
    %v144 = vld [vmem:[%s143] sm:$0xff]
    %s145 = scalar_lea.vmem [#allocation7], 24
    %v146 = vld [vmem:[%s145] sm:$0xff]
    %v147 = vmul.f32 %v142, %v77
    %v148 = vmul.f32 %v142, %v78
    %v149 = vmul.f32 %v144, %v79
    %v150 = vadd.f32 %v149, %v146
    %v151 = vadd.f32 %v147, %v150
    %v152 = vadd.f32 %v148, %v150
    %v153 = vxor.u32 %v151, 2147483648
    %v154 = vxor.u32 %v152, 2147483648
    %v155 = vmul.f32 %v153, 1.442695
    %v156 = vpow.pop %v155
    %v157 = vmul.f32 %v154, 1.442695
    %v158 = vpow.pop %v157
    %v159 = vadd.f32 %v156, 1.0
    %v160 = vadd.f32 %v158, 1.0
    %v161 = vrcp.pop %v159
    %v162 = vmul.f32 1.0, %v161
    %v163 = vrcp.pop %v160
    %v164 = vmul.f32 1.0, %v163
    %v165 = vmul.f32 %v124, %v80
    %v166 = vmul.f32 %v126, %v80
    %v167 = vmul.f32 %v100, %v139
    %v168 = vmul.f32 %v102, %v140
    %v169 = vadd.f32 %v165, %v167
    %v170 = vadd.f32 %v166, %v168
    %v171 = vtanh.pop %v169
    %v172 = vtanh.pop %v170
    %v173 = vmul.f32 %v162, %v171
    %v174 = vmul.f32 %v164, %v172
    %175 = vst [vmem:[#allocation10] sm:$0xff] %v173
    %176 = vst [vmem:[#allocation10 + $0x8] sm:$0xff] %v174
    %177 = vst [vmem:[#allocation11] sm:$0xff] %v169
    %178 = vst [vmem:[#allocation11 + $0x8] sm:$0xff] %v170
    // Predicated region
    $region38: #{i_to_i_lstm_cell_padded.1} parent=1 // pred_check
      _
    $region39: #{i_to_i_lstm_cell_padded.1} parent=1 // pred_check_branch
      %180 = sbr.rel (0) target = $region41
    $region40: #{i_to_i_lstm_cell_padded.1} parent=1 // pred_region
      %s182 = ssub.s32 256, 256
      %183 = vsyncadd [#allocation4], %s182
      %s184 = sshll.u32 [#allocation10], 4
      %s185 = int_to_ptr.vmem [resolvable:$true] %s184
      %190 = dma.vmem_to_hbm [thread:$0]  %s185, 256, %s5, [#allocation4], 128, 128, 8
    $region41: #{i_to_i_lstm_cell_padded.1} parent=1 // pred_fallthru
      _
    // Predicated region
    $region42: #{i_to_i_lstm_cell_padded.1} parent=1 // pred_check
      _
    $region43: #{i_to_i_lstm_cell_padded.1} parent=1 // pred_check_branch
      %192 = sbr.rel (0) target = $region45
    $region44: #{i_to_i_lstm_cell_padded.1} parent=1 // pred_region
      %s194 = ssub.s32 256, 256
      %195 = vsyncadd [#allocation12], %s194
      %s196 = sshll.u32 [#allocation11], 4
      %s197 = int_to_ptr.vmem [resolvable:$true] %s196
      %202 = dma.vmem_to_hbm [thread:$0]  %s197, 256, %s6, [#allocation12], 128, 128, 8
    $region45: #{i_to_i_lstm_cell_padded.1} parent=1 // pred_fallthru
      _
    // Predicated region
    $region46: #{i_to_i_lstm_cell_padded.1} parent=1 // pred_check
      _
    $region47: #{i_to_i_lstm_cell_padded.1} parent=1 // pred_check_branch
      %204 = sbr.rel (0) target = $region49
    $region48: #{i_to_i_lstm_cell_padded.1} parent=1 // pred_region
      %205 = dma.done [#allocation4], 256
    $region49: #{i_to_i_lstm_cell_padded.1} parent=1 // pred_fallthru
      _
    // Predicated region
    $region50: #{i_to_i_lstm_cell_padded.1} parent=1 // pred_check
      _
    $region51: #{i_to_i_lstm_cell_padded.1} parent=1 // pred_check_branch
      %207 = sbr.rel (0) target = $region53
    $region52: #{i_to_i_lstm_cell_padded.1} parent=1 // pred_region
      %208 = dma.done [#allocation12], 256
    $region53: #{i_to_i_lstm_cell_padded.1} parent=1 // pred_fallthru
      _
    %209 = vsyncpa [#allocation3], 1
    %210 = vsyncpa [#allocation6], 1
    %211 = vsyncpa [#allocation9], 1
    %212 = vsyncpa [#allocation4], 1
    %213 = vsyncpa [#allocation12], 1

</llo_original>
